<compile_context>
chip_gen: v7x
topology: tpu7x:2x2x1
jax: 0.10.0
libtpu: 0.0.40
codegen_flags: <defaults>
</compile_context>

<pallas_src>
import jax
import jax.numpy as jnp
from jax.experimental import pallas as pl
from jax.experimental.pallas import tpu as pltpu

EPS = 1e-5  # torch.sqrt(sigma + 1e-05) in the reference module


def _layernorm_kernel(x_ref, g_ref, b_ref, o_ref):
    """LayerNorm over the last dim with affine (weight, bias).

    x_ref: (TILE_M, C) activation tile
    g_ref: (1, C) weight, b_ref: (1, C) bias (replicated across grid steps)
    """
    x = x_ref[...].astype(jnp.float32)
    c = x.shape[-1]
    inv_c = 1.0 / float(c)
    # Single-pass moments: E[x] and E[x^2] from one sweep over the lane axis.
    s = jnp.sum(x, axis=-1, keepdims=True)
    sq = jnp.sum(x * x, axis=-1, keepdims=True)
    mu = s * inv_c
    var = sq * inv_c - mu * mu          # biased variance (unbiased=False)
    inv = jax.lax.rsqrt(var + EPS)
    y = (x - mu) * inv * g_ref[...] + b_ref[...]
    o_ref[...] = y.astype(o_ref.dtype)


def with_bias_layernorm(x, weight, bias, *, tile_m=512):
    """Apply WithBias_LayerNorm over the last dim of x (any leading dims)."""
    orig_shape = x.shape
    C = orig_shape[-1]
    M = 1
    for d in orig_shape[:-1]:
        M *= d
    x2 = x.reshape(M, C)
    w2 = weight.reshape(1, C).astype(jnp.float32)
    b2 = bias.reshape(1, C).astype(jnp.float32)

    # Tile the flattened row dim.  Block last dim is the full channel dim (so
    # the reduction stays inside one block); sublane dim is a multiple of 8.
    tm = min(tile_m, M)
    if tm != M:
        tm = max(8, (tm // 8) * 8)
    grid = (pl.cdiv(M, tm),)

    out = pl.pallas_call(
        _layernorm_kernel,
        out_shape=jax.ShapeDtypeStruct((M, C), x.dtype),
        grid=grid,
        in_specs=[
            pl.BlockSpec((tm, C), lambda i: (i, 0)),
            pl.BlockSpec((1, C), lambda i: (0, 0)),
            pl.BlockSpec((1, C), lambda i: (0, 0)),
        ],
        out_specs=pl.BlockSpec((tm, C), lambda i: (i, 0)),
        compiler_params=pltpu.CompilerParams(
            dimension_semantics=("parallel",),     # shard rows across TCs (v7x)
            vmem_limit_bytes=32 * 1024 * 1024,     # explicit; safe on v5e..v7x
        ),
    )(x2, w2, b2)
    return out.reshape(orig_shape)


if __name__ == "__main__":
    key = jax.random.PRNGKey(0)
    kx, kw, kb = jax.random.split(key, 3)

    # Small but lane-dense shapes: x normalized over the last (channel) dim.
    B, H, W, C = 2, 32, 32, 128          # M = 2048 rows -> 4 parallel grid steps
    x = jax.random.normal(kx, (B, H, W, C), jnp.float32)
    weight = 1.0 + 0.05 * jax.random.normal(kw, (C,), jnp.float32)
    bias = 0.05 * jax.random.normal(kb, (C,), jnp.float32)

    fwd = jax.jit(with_bias_layernorm)
    out = jax.block_until_ready(fwd(x, weight, bias))

    # Pure-JAX reference matching the PyTorch module exactly.
    mu = jnp.mean(x, axis=-1, keepdims=True)
    var = jnp.mean((x - mu) ** 2, axis=-1, keepdims=True)   # unbiased=False
    ref = (x - mu) / jnp.sqrt(var + EPS) * weight + bias

    assert out.shape == x.shape, out.shape
    assert bool(jnp.all(jnp.isfinite(out)))
    max_err = float(jnp.max(jnp.abs(out - ref)))
    assert max_err < 1e-4, max_err
    print("KERNEL_OK")
</pallas_src>

<mosaic_0001>
module attributes {stable_mosaic.version = 11 : i64} {
  func.func @_layernorm_kernel(%arg0: i32, %arg1: memref<512x128xf32, #tpu.memory_space<vmem>>, %arg2: memref<1x128xf32, #tpu.memory_space<vmem>>, %arg3: memref<1x128xf32, #tpu.memory_space<vmem>>, %arg4: memref<512x128xf32, #tpu.memory_space<vmem>>) attributes {dimension_semantics = [#tpu.dimension_semantics<parallel>], iteration_bounds = array<i64: 4>, scalar_prefetch = 0 : i64, scratch_operands = 0 : i64, tpu.core_type = #tpu.core_type<tc>, window_params = [{transform_indices = @transform_0, window_bounds = array<i64: 512, 128>}, {pipeline_mode = #tpu.pipeline_mode<synchronous>, transform_indices = @transform_1, window_bounds = array<i64: 1, 128>}, {pipeline_mode = #tpu.pipeline_mode<synchronous>, transform_indices = @transform_2, window_bounds = array<i64: 1, 128>}, {transform_indices = @transform_3, window_bounds = array<i64: 512, 128>}]} {
    %c0 = arith.constant 0 : index
    %c0_0 = arith.constant 0 : index
    %0 = vector.load %arg1[%c0, %c0_0] : memref<512x128xf32, #tpu.memory_space<vmem>>, vector<512x128xf32>
    %cst = arith.constant dense<0.000000e+00> : vector<512xf32>
    %1 = vector.multi_reduction <add>, %0, %cst [1] : vector<512x128xf32> to vector<512xf32>
    %2 = vector.shape_cast %1 : vector<512xf32> to vector<512x1xf32>
    %3 = arith.mulf %0, %0 : vector<512x128xf32>
    %cst_1 = arith.constant dense<0.000000e+00> : vector<512xf32>
    %4 = vector.multi_reduction <add>, %3, %cst_1 [1] : vector<512x128xf32> to vector<512xf32>
    %5 = vector.shape_cast %4 : vector<512xf32> to vector<512x1xf32>
    %cst_2 = arith.constant 7.812500e-03 : f32
    %6 = vector.broadcast %cst_2 : f32 to vector<512x1xf32>
    %7 = arith.mulf %2, %6 : vector<512x1xf32>
    %cst_3 = arith.constant 7.812500e-03 : f32
    %8 = vector.broadcast %cst_3 : f32 to vector<512x1xf32>
    %9 = arith.mulf %5, %8 : vector<512x1xf32>
    %10 = arith.mulf %7, %7 : vector<512x1xf32>
    %11 = arith.subf %9, %10 : vector<512x1xf32>
    %cst_4 = arith.constant 9.99999974E-6 : f32
    %12 = vector.broadcast %cst_4 : f32 to vector<512x1xf32>
    %13 = arith.addf %11, %12 : vector<512x1xf32>
    %14 = math.rsqrt %13 : vector<512x1xf32>
    %15 = vector.broadcast %7 : vector<512x1xf32> to vector<512x128xf32>
    %16 = arith.subf %0, %15 : vector<512x128xf32>
    %17 = vector.broadcast %14 : vector<512x1xf32> to vector<512x128xf32>
    %18 = arith.mulf %16, %17 : vector<512x128xf32>
    %c0_5 = arith.constant 0 : index
    %c0_6 = arith.constant 0 : index
    %19 = vector.load %arg2[%c0_5, %c0_6] : memref<1x128xf32, #tpu.memory_space<vmem>>, vector<1x128xf32>
    %20 = vector.broadcast %19 : vector<1x128xf32> to vector<512x128xf32>
    %21 = arith.mulf %18, %20 : vector<512x128xf32>
    %c0_7 = arith.constant 0 : index
    %c0_8 = arith.constant 0 : index
    %22 = vector.load %arg3[%c0_7, %c0_8] : memref<1x128xf32, #tpu.memory_space<vmem>>, vector<1x128xf32>
    %23 = vector.broadcast %22 : vector<1x128xf32> to vector<512x128xf32>
    %24 = arith.addf %21, %23 : vector<512x128xf32>
    %c0_9 = arith.constant 0 : index
    %c0_10 = arith.constant 0 : index
    %25 = vector.load %arg4[%c0_9, %c0_10] : memref<512x128xf32, #tpu.memory_space<vmem>>, vector<512x128xf32>
    tpu.vector_store %arg4[%c0_9, %c0_10], %24 {strides = array<i32>} : memref<512x128xf32, #tpu.memory_space<vmem>>, vector<512x128xf32>,
    return
  }
  func.func @transform_0(%arg0: i32) -> (i32, i32) {
    %c0_i32 = arith.constant 0 : i32
    %c0_i32_0 = arith.constant 0 : i32
    return %arg0, %c0_i32 : i32, i32
  }
  func.func @transform_1(%arg0: i32) -> (i32, i32) {
    %c0_i32 = arith.constant 0 : i32
    %c0_i32_0 = arith.constant 0 : i32
    %c0_i32_1 = arith.constant 0 : i32
    return %c0_i32, %c0_i32_0 : i32, i32
  }
  func.func @transform_2(%arg0: i32) -> (i32, i32) {
    %c0_i32 = arith.constant 0 : i32
    %c0_i32_0 = arith.constant 0 : i32
    %c0_i32_1 = arith.constant 0 : i32
    return %c0_i32, %c0_i32_0 : i32, i32
  }
  func.func @transform_3(%arg0: i32) -> (i32, i32) {
    %c0_i32 = arith.constant 0 : i32
    %c0_i32_0 = arith.constant 0 : i32
    return %arg0, %c0_i32 : i32, i32
  }
}

</mosaic_0001>

<llo_original>
// kernel: with_bias_layernorm.1
$region0: #{with_bias_layernorm.1}
  #allocation0 [shape = 'u32[]', space=smem, size = 0x4, offset = 0x4, fixed_abs, tag = 'smem constant byte address 0x4 - core index']
  #allocation1 [shape = 'u32[144,128]{1,0:T(1,128)}', space=vmem, size = 0x12000, scoped, tag = 'internal scratch']
  %s0 = inlined_call_operand.hbm [shape: f32[2048,128], index: 0, kind: input, shape index: {}]
  %s1 = inlined_call_operand.vmem [shape: f32[1,128], index: 1, kind: input, shape index: {}]
  %s2 = inlined_call_operand.vmem [shape: f32[1,128], index: 2, kind: input, shape index: {}]
  %s3 = inlined_call_operand.hbm [shape: f32[2048,128], index: 3, kind: output, shape index: {}]
  %s4 = sld [smem:[#allocation0]]
  $region49: #{with_bias_layernorm.1} parent=0
    _
  %s6 = ssub.s32 1, %s4
  %s7 = scalar_select 0, %s6, %s4
  $region1: #{with_bias_layernorm.1} parent=0
    #allocation2 [shape = 'u8[524288]{0}', space=vmem, size = 0x80000, scoped, tag = 'input window, operand 0']
    #allocation3 [shape = 's32[2]{0}', space=sflag, size = 0x8, scoped, tag = 'scoped memory for with_bias_layernorm.1']
    #allocation4 [shape = 's32[2]{0}', space=sflag, size = 0x8, scoped, tag = 'scoped memory for with_bias_layernorm.1']
    #allocation5 [shape = 'u8[524288]{0}', space=vmem, size = 0x80000, scoped, tag = 'output window, operand 0']
    %8 = vsyncpa [#allocation3], 0
    %s9 = scalar_lea.sflag [#allocation3], 1
    %10 = vsyncpa %s9, 0
    %11 = vsyncpa [#allocation4], 0
    %s12 = scalar_lea.sflag [#allocation4], 1
    %13 = vsyncpa %s12, 0
    loop: start=0, step=1, limit=6
    $region2: #{with_bias_layernorm.1} parent=1 // loop_pre_header
      _
    $region3: #{with_bias_layernorm.1} parent=1 // loop_header
      %s15 = sphi 0, %s19
      %p16 = scmp.ge.s32.totalorder %s15, 6
      %s25 = sphi 0, %s27
      %s28 = sphi 0, %s25
      %s29 = sphi 0, %s28
      %s45 = sphi 0, %s29
      %s49 = sphi 0, %s49
      %s51 = sphi 0, %s49
      %s52 = sphi 0, %s51
      %s66 = sphi 0, %s52
      %s70 = sphi 0, %s70
      %s72 = sphi 0, %s70
      %s73 = sphi 0, %s72
      %s87 = sphi 0, %s73
      %s93 = sphi 0, %s95
      %s96 = sphi 0, %s93
      %s97 = sphi 0, %s96
      %s113 = sphi 0, %s97
    $region4: #{with_bias_layernorm.1} parent=1 // loop_header_branch
      %18 = sbr.rel (%p16) target = $region8
    $region5: #{with_bias_layernorm.1} parent=1 // loop_body
      %s20 = ssub.s32 %s15, 1
      %s21 = ssub.s32 %s15, 2
      %s22 = sadd.s32 %s15, 1
      %s23 = ssub.s32 %s15, %s22
      %p24 = scmp.eq.s32.totalorder %s23, 0
      %s26 = sadd.s32 %s25, 1
      %s27 = scalar_select %p24, %s25, %s26
      %p30 = pneg %p24
      %p31 = scmp.eq.s32.totalorder %s15, 3
      %p32 = por %p30, %p31
      %p33 = scmp.ne.s32.totalorder %s25, %s28
      %p34 = scmp.eq.s32.totalorder %s15, 0
      %p35 = por %p33, %p34
      %p36 = scmp.ne.s32.totalorder %s25, %s28
      %p37 = scmp.eq.s32.totalorder %s20, 3
      %p38 = por %p36, %p37
      %p39 = scmp.ne.s32.totalorder %s28, %s29
      %p40 = scmp.eq.s32.totalorder %s20, 0
      %p41 = por %p39, %p40
      %p42 = scmp.ne.s32.totalorder %s28, %s29
      %p43 = scmp.eq.s32.totalorder %s21, 3
      %p44 = por %p42, %p43
      %p46 = scmp.ne.s32.totalorder %s29, %s45
      %p47 = scmp.eq.s32.totalorder %s21, 0
      %p48 = por %p46, %p47
      %s50 = sadd.s32 %s49, 1
      %p53 = scmp.eq.s32.totalorder %s15, 3
      %p54 = scmp.ne.s32.totalorder %s49, %s51
      %p55 = scmp.eq.s32.totalorder %s15, 0
      %p56 = por %p54, %p55
      %p57 = scmp.ne.s32.totalorder %s49, %s51
      %p58 = scmp.eq.s32.totalorder %s20, 3
      %p59 = por %p57, %p58
      %p60 = scmp.ne.s32.totalorder %s51, %s52
      %p61 = scmp.eq.s32.totalorder %s20, 0
      %p62 = por %p60, %p61
      %p63 = scmp.ne.s32.totalorder %s51, %s52
      %p64 = scmp.eq.s32.totalorder %s21, 3
      %p65 = por %p63, %p64
      %p67 = scmp.ne.s32.totalorder %s52, %s66
      %p68 = scmp.eq.s32.totalorder %s21, 0
      %p69 = por %p67, %p68
      %s71 = sadd.s32 %s70, 1
      %p74 = scmp.eq.s32.totalorder %s15, 3
      %p75 = scmp.ne.s32.totalorder %s70, %s72
      %p76 = scmp.eq.s32.totalorder %s15, 0
      %p77 = por %p75, %p76
      %p78 = scmp.ne.s32.totalorder %s70, %s72
      %p79 = scmp.eq.s32.totalorder %s20, 3
      %p80 = por %p78, %p79
      %p81 = scmp.ne.s32.totalorder %s72, %s73
      %p82 = scmp.eq.s32.totalorder %s20, 0
      %p83 = por %p81, %p82
      %p84 = scmp.ne.s32.totalorder %s72, %s73
      %p85 = scmp.eq.s32.totalorder %s21, 3
      %p86 = por %p84, %p85
      %p88 = scmp.ne.s32.totalorder %s73, %s87
      %p89 = scmp.eq.s32.totalorder %s21, 0
      %p90 = por %p88, %p89
      %s91 = ssub.s32 %s15, %s22
      %p92 = scmp.eq.s32.totalorder %s91, 0
      %s94 = sadd.s32 %s93, 1
      %s95 = scalar_select %p92, %s93, %s94
      %p98 = pneg %p92
      %p99 = scmp.eq.s32.totalorder %s15, 3
      %p100 = por %p98, %p99
      %p101 = scmp.ne.s32.totalorder %s93, %s96
      %p102 = scmp.eq.s32.totalorder %s15, 0
      %p103 = por %p101, %p102
      %p104 = scmp.ne.s32.totalorder %s93, %s96
      %p105 = scmp.eq.s32.totalorder %s20, 3
      %p106 = por %p104, %p105
      %p107 = scmp.ne.s32.totalorder %s96, %s97
      %p108 = scmp.eq.s32.totalorder %s20, 0
      %p109 = por %p107, %p108
      %p110 = scmp.ne.s32.totalorder %s96, %s97
      %p111 = scmp.eq.s32.totalorder %s21, 3
      %p112 = por %p110, %p111
      %p114 = scmp.ne.s32.totalorder %s97, %s113
      %p115 = scmp.eq.s32.totalorder %s21, 0
      %p116 = por %p114, %p115
      %p117 = scmp.le.s32.totalorder 1, %s15
      %p118 = scmp.lt.s32.totalorder %s15, 5
      %p119 = pnand %p117, %p118
      %p120 = pneg %p119
      // Predicated region
      $region9: #{with_bias_layernorm.1} parent=5 // pred_check
        _
      $region10: #{with_bias_layernorm.1} parent=5 // pred_check_branch
        %122 = sbr.rel (%p119) target = $region12
      $region11: #{with_bias_layernorm.1} parent=5 // pred_region
        %s123 = ssub.s32 %s15, 1
        // Predicated region
        $region13: #{with_bias_layernorm.1} parent=11 // pred_check
          %p124 = pneg %p62
        $region14: #{with_bias_layernorm.1} parent=11 // pred_check_branch
          %126 = sbr.rel (%p124) target = $region16
        $region15: #{with_bias_layernorm.1} parent=11 // pred_region
          _
        $region16: #{with_bias_layernorm.1} parent=11 // pred_fallthru
          _
        // Predicated region
        $region17: #{with_bias_layernorm.1} parent=11 // pred_check
          %p127 = pneg %p83
        $region18: #{with_bias_layernorm.1} parent=11 // pred_check_branch
          %129 = sbr.rel (%p127) target = $region20
        $region19: #{with_bias_layernorm.1} parent=11 // pred_region
          _
        $region20: #{with_bias_layernorm.1} parent=11 // pred_fallthru
          _
      $region12: #{with_bias_layernorm.1} parent=5 // pred_fallthru
        _
      %p130 = scmp.lt.s32.totalorder %s15, 4
      // Predicated region
      $region21: #{with_bias_layernorm.1} parent=5 // pred_check
        %p131 = pneg %p130
      $region22: #{with_bias_layernorm.1} parent=5 // pred_check_branch
        %133 = sbr.rel (%p131) target = $region24
      $region23: #{with_bias_layernorm.1} parent=5 // pred_region
        // Predicated region
        $region25: #{with_bias_layernorm.1} parent=23 // pred_check
          %p134 = pneg %p35
        $region26: #{with_bias_layernorm.1} parent=23 // pred_check_branch
          %136 = sbr.rel (%p134) target = $region28
        $region27: #{with_bias_layernorm.1} parent=23 // pred_region
          %s137 = sand.u32 %s25, 1
          %s138 = scalar_lea.sflag [#allocation3], %s137
          %s139 = sand.u32 %s25, 1
          %s140 = smul.addr %s139, 512
          %s141 = scalar_lea.vmem [#allocation2], %s140
          %s142 = smul.u32 64, %s15
          %s144 = ssub.s32 8192, 8192
          %145 = vsyncadd %s138, %s144
          %s146 = smul.addr %s142, 128
          %s147 = scalar_lea.hbm %s0, %s146
          %s148 = sshll.u32 %s141, 4
          %s149 = int_to_ptr.vmem [resolvable:$true] %s148
          %154 = dma.hbm_to_vmem [thread:$0]  %s147, 8192, %s149, %s138, 128, 128, 8
        $region28: #{with_bias_layernorm.1} parent=23 // pred_fallthru
          _
      $region24: #{with_bias_layernorm.1} parent=5 // pred_fallthru
        _
      %p155 = scmp.le.s32.totalorder 1, %s15
      %p156 = scmp.lt.s32.totalorder %s15, 5
      %p157 = pnand %p155, %p156
      %p158 = pneg %p157
      // Predicated region
      $region29: #{with_bias_layernorm.1} parent=5 // pred_check
        _
      $region30: #{with_bias_layernorm.1} parent=5 // pred_check_branch
        %160 = sbr.rel (%p157) target = $region32
      $region31: #{with_bias_layernorm.1} parent=5 // pred_region
        %s161 = ssub.s32 %s15, 1
        %s162 = sand.u32 %s28, 1
        %s163 = scalar_lea.sflag [#allocation3], %s162
        %s164 = sand.u32 %s28, 1
        %s165 = smul.addr %s164, 512
        %s166 = scalar_lea.vmem [#allocation2], %s165
        // Predicated region
        $region33: #{with_bias_layernorm.1} parent=31 // pred_check
          %p167 = pneg %p41
        $region34: #{with_bias_layernorm.1} parent=31 // pred_check_branch
          %169 = sbr.rel (%p167) target = $region36
        $region35: #{with_bias_layernorm.1} parent=31 // pred_region
          %170 = dma.done %s163, 8192
        $region36: #{with_bias_layernorm.1} parent=31 // pred_fallthru
          _
        %s171 = sand.u32 %s28, 1
        %s172 = scalar_lea.sflag [#allocation3], %s171
        %s173 = sand.u32 %s28, 1
        %s174 = smul.addr %s173, 512
        %s175 = scalar_lea.vmem [#allocation2], %s174
        %p176 = pneg %p41
        %p177 = pneg %p38
        %p178 = pneg %p62
        %p179 = pneg %p59
        %p180 = pneg %p83
        %p181 = pneg %p80
        %p182 = pneg %p109
        %p183 = pneg %p106
        %s184 = sand.u32 %s96, 1
        %s185 = scalar_lea.sflag [#allocation4], %s184
        %s186 = sand.u32 %s96, 1
        %s187 = smul.addr %s186, 512
        %s188 = scalar_lea.vmem [#allocation5], %s187
        %s189 = smul.u32 64, %s20
        %s190 = smul.u32 64, %s20
        %v191 = vld [vmem:[%s166] sm:$0xff]
        %v192 = vld [vmem:[%s166 + $0x8] sm:$0xff]
        %v193 = vld [vmem:[%s166 + $0x10] sm:$0xff]
        %v194 = vld [vmem:[%s166 + $0x18] sm:$0xff]
        %v195 = vld [vmem:[%s166 + $0x20] sm:$0xff]
        %v196 = vld [vmem:[%s166 + $0x28] sm:$0xff]
        %v197 = vld [vmem:[%s166 + $0x30] sm:$0xff]
        %v198 = vld [vmem:[%s166 + $0x38] sm:$0xff]
        %v199 = vld [vmem:[%s166 + $0x40] sm:$0xff]
        %v200 = vld [vmem:[%s166 + $0x48] sm:$0xff]
        %v201 = vld [vmem:[%s166 + $0x50] sm:$0xff]
        %v202 = vld [vmem:[%s166 + $0x58] sm:$0xff]
        %v203 = vld [vmem:[%s166 + $0x60] sm:$0xff]
        %v204 = vld [vmem:[%s166 + $0x68] sm:$0xff]
        %v205 = vld [vmem:[%s166 + $0x70] sm:$0xff]
        %v206 = vld [vmem:[%s166 + $0x78] sm:$0xff]
        %v207 = vld [vmem:[%s166 + $0x80] sm:$0xff]
        %v208 = vld [vmem:[%s166 + $0x88] sm:$0xff]
        %v209 = vld [vmem:[%s166 + $0x90] sm:$0xff]
        %v210 = vld [vmem:[%s166 + $0x98] sm:$0xff]
        %v211 = vld [vmem:[%s166 + $0xa0] sm:$0xff]
        %v212 = vld [vmem:[%s166 + $0xa8] sm:$0xff]
        %v213 = vld [vmem:[%s166 + $0xb0] sm:$0xff]
        %v214 = vld [vmem:[%s166 + $0xb8] sm:$0xff]
        %v215 = vld [vmem:[%s166 + $0xc0] sm:$0xff]
        %v216 = vld [vmem:[%s166 + $0xc8] sm:$0xff]
        %v217 = vld [vmem:[%s166 + $0xd0] sm:$0xff]
        %v218 = vld [vmem:[%s166 + $0xd8] sm:$0xff]
        %v219 = vld [vmem:[%s166 + $0xe0] sm:$0xff]
        %v220 = vld [vmem:[%s166 + $0xe8] sm:$0xff]
        %v221 = vld [vmem:[%s166 + $0xf0] sm:$0xff]
        %v222 = vld [vmem:[%s166 + $0xf8] sm:$0xff]
        %v223 = vld [vmem:[%s166 + $0x100] sm:$0xff]
        %v224 = vld [vmem:[%s166 + $0x108] sm:$0xff]
        %v225 = vld [vmem:[%s166 + $0x110] sm:$0xff]
        %v226 = vld [vmem:[%s166 + $0x118] sm:$0xff]
        %v227 = vld [vmem:[%s166 + $0x120] sm:$0xff]
        %v228 = vld [vmem:[%s166 + $0x128] sm:$0xff]
        %v229 = vld [vmem:[%s166 + $0x130] sm:$0xff]
        %v230 = vld [vmem:[%s166 + $0x138] sm:$0xff]
        %v231 = vld [vmem:[%s166 + $0x140] sm:$0xff]
        %v232 = vld [vmem:[%s166 + $0x148] sm:$0xff]
        %v233 = vld [vmem:[%s166 + $0x150] sm:$0xff]
        %v234 = vld [vmem:[%s166 + $0x158] sm:$0xff]
        %v235 = vld [vmem:[%s166 + $0x160] sm:$0xff]
        %v236 = vld [vmem:[%s166 + $0x168] sm:$0xff]
        %v237 = vld [vmem:[%s166 + $0x170] sm:$0xff]
        %v238 = vld [vmem:[%s166 + $0x178] sm:$0xff]
        %v239 = vld [vmem:[%s166 + $0x180] sm:$0xff]
        %v240 = vld [vmem:[%s166 + $0x188] sm:$0xff]
        %v241 = vld [vmem:[%s166 + $0x190] sm:$0xff]
        %v242 = vld [vmem:[%s166 + $0x198] sm:$0xff]
        %v243 = vld [vmem:[%s166 + $0x1a0] sm:$0xff]
        %v244 = vld [vmem:[%s166 + $0x1a8] sm:$0xff]
        %v245 = vld [vmem:[%s166 + $0x1b0] sm:$0xff]
        %v246 = vld [vmem:[%s166 + $0x1b8] sm:$0xff]
        %v247 = vld [vmem:[%s166 + $0x1c0] sm:$0xff]
        %v248 = vld [vmem:[%s166 + $0x1c8] sm:$0xff]
        %v249 = vld [vmem:[%s166 + $0x1d0] sm:$0xff]
        %v250 = vld [vmem:[%s166 + $0x1d8] sm:$0xff]
        %v251 = vld [vmem:[%s166 + $0x1e0] sm:$0xff]
        %v252 = vld [vmem:[%s166 + $0x1e8] sm:$0xff]
        %v253 = vld [vmem:[%s166 + $0x1f0] sm:$0xff]
        %v254 = vld [vmem:[%s166 + $0x1f8] sm:$0xff]
        %255 = vadd.xlane.f32.xlu0 %v191
        %v256 = vpop.xlane.xlu0 %255
        %257 = vadd.xlane.f32.xlu0 %v192
        %v258 = vpop.xlane.xlu0 %257
        %259 = vadd.xlane.f32.xlu0 %v193
        %v260 = vpop.xlane.xlu0 %259
        %261 = vadd.xlane.f32.xlu0 %v194
        %v262 = vpop.xlane.xlu0 %261
        %263 = vadd.xlane.f32.xlu0 %v195
        %v264 = vpop.xlane.xlu0 %263
        %265 = vadd.xlane.f32.xlu0 %v196
        %v266 = vpop.xlane.xlu0 %265
        %267 = vadd.xlane.f32.xlu0 %v197
        %v268 = vpop.xlane.xlu0 %267
        %269 = vadd.xlane.f32.xlu0 %v198
        %v270 = vpop.xlane.xlu0 %269
        %271 = vadd.xlane.f32.xlu0 %v199
        %v272 = vpop.xlane.xlu0 %271
        %273 = vadd.xlane.f32.xlu0 %v200
        %v274 = vpop.xlane.xlu0 %273
        %275 = vadd.xlane.f32.xlu0 %v201
        %v276 = vpop.xlane.xlu0 %275
        %277 = vadd.xlane.f32.xlu0 %v202
        %v278 = vpop.xlane.xlu0 %277
        %279 = vadd.xlane.f32.xlu0 %v203
        %v280 = vpop.xlane.xlu0 %279
        %281 = vadd.xlane.f32.xlu0 %v204
        %v282 = vpop.xlane.xlu0 %281
        %283 = vadd.xlane.f32.xlu0 %v205
        %v284 = vpop.xlane.xlu0 %283
        %285 = vadd.xlane.f32.xlu0 %v206
        %v286 = vpop.xlane.xlu0 %285
        %287 = vadd.xlane.f32.xlu0 %v207
        %v288 = vpop.xlane.xlu0 %287
        %289 = vadd.xlane.f32.xlu0 %v208
        %v290 = vpop.xlane.xlu0 %289
        %291 = vadd.xlane.f32.xlu0 %v209
        %v292 = vpop.xlane.xlu0 %291
        %293 = vadd.xlane.f32.xlu0 %v210
        %v294 = vpop.xlane.xlu0 %293
        %295 = vadd.xlane.f32.xlu0 %v211
        %v296 = vpop.xlane.xlu0 %295
        %297 = vadd.xlane.f32.xlu0 %v212
        %v298 = vpop.xlane.xlu0 %297
        %299 = vadd.xlane.f32.xlu0 %v213
        %v300 = vpop.xlane.xlu0 %299
        %301 = vadd.xlane.f32.xlu0 %v214
        %v302 = vpop.xlane.xlu0 %301
        %303 = vadd.xlane.f32.xlu0 %v215
        %v304 = vpop.xlane.xlu0 %303
        %305 = vadd.xlane.f32.xlu0 %v216
        %v306 = vpop.xlane.xlu0 %305
        %307 = vadd.xlane.f32.xlu0 %v217
        %v308 = vpop.xlane.xlu0 %307
        %309 = vadd.xlane.f32.xlu0 %v218
        %v310 = vpop.xlane.xlu0 %309
        %311 = vadd.xlane.f32.xlu0 %v219
        %v312 = vpop.xlane.xlu0 %311
        %313 = vadd.xlane.f32.xlu0 %v220
        %v314 = vpop.xlane.xlu0 %313
        %315 = vadd.xlane.f32.xlu0 %v221
        %v316 = vpop.xlane.xlu0 %315
        %317 = vadd.xlane.f32.xlu0 %v222
        %v318 = vpop.xlane.xlu0 %317
        %319 = vadd.xlane.f32.xlu0 %v223
        %v320 = vpop.xlane.xlu0 %319
        %321 = vadd.xlane.f32.xlu0 %v224
        %v322 = vpop.xlane.xlu0 %321
        %323 = vadd.xlane.f32.xlu0 %v225
        %v324 = vpop.xlane.xlu0 %323
        %325 = vadd.xlane.f32.xlu0 %v226
        %v326 = vpop.xlane.xlu0 %325
        %327 = vadd.xlane.f32.xlu0 %v227
        %v328 = vpop.xlane.xlu0 %327
        %329 = vadd.xlane.f32.xlu0 %v228
        %v330 = vpop.xlane.xlu0 %329
        %331 = vadd.xlane.f32.xlu0 %v229
        %v332 = vpop.xlane.xlu0 %331
        %333 = vadd.xlane.f32.xlu0 %v230
        %v334 = vpop.xlane.xlu0 %333
        %335 = vadd.xlane.f32.xlu0 %v231
        %v336 = vpop.xlane.xlu0 %335
        %337 = vadd.xlane.f32.xlu0 %v232
        %v338 = vpop.xlane.xlu0 %337
        %339 = vadd.xlane.f32.xlu0 %v233
        %v340 = vpop.xlane.xlu0 %339
        %341 = vadd.xlane.f32.xlu0 %v234
        %v342 = vpop.xlane.xlu0 %341
        %343 = vadd.xlane.f32.xlu0 %v235
        %v344 = vpop.xlane.xlu0 %343
        %345 = vadd.xlane.f32.xlu0 %v236
        %v346 = vpop.xlane.xlu0 %345
        %347 = vadd.xlane.f32.xlu0 %v237
        %v348 = vpop.xlane.xlu0 %347
        %349 = vadd.xlane.f32.xlu0 %v238
        %v350 = vpop.xlane.xlu0 %349
        %351 = vadd.xlane.f32.xlu0 %v239
        %v352 = vpop.xlane.xlu0 %351
        %353 = vadd.xlane.f32.xlu0 %v240
        %v354 = vpop.xlane.xlu0 %353
        %355 = vadd.xlane.f32.xlu0 %v241
        %v356 = vpop.xlane.xlu0 %355
        %357 = vadd.xlane.f32.xlu0 %v242
        %v358 = vpop.xlane.xlu0 %357
        %359 = vadd.xlane.f32.xlu0 %v243
        %v360 = vpop.xlane.xlu0 %359
        %361 = vadd.xlane.f32.xlu0 %v244
        %v362 = vpop.xlane.xlu0 %361
        %363 = vadd.xlane.f32.xlu0 %v245
        %v364 = vpop.xlane.xlu0 %363
        %365 = vadd.xlane.f32.xlu0 %v246
        %v366 = vpop.xlane.xlu0 %365
        %367 = vadd.xlane.f32.xlu0 %v247
        %v368 = vpop.xlane.xlu0 %367
        %369 = vadd.xlane.f32.xlu0 %v248
        %v370 = vpop.xlane.xlu0 %369
        %371 = vadd.xlane.f32.xlu0 %v249
        %v372 = vpop.xlane.xlu0 %371
        %373 = vadd.xlane.f32.xlu0 %v250
        %v374 = vpop.xlane.xlu0 %373
        %375 = vadd.xlane.f32.xlu0 %v251
        %v376 = vpop.xlane.xlu0 %375
        %377 = vadd.xlane.f32.xlu0 %v252
        %v378 = vpop.xlane.xlu0 %377
        %379 = vadd.xlane.f32.xlu0 %v253
        %v380 = vpop.xlane.xlu0 %379
        %381 = vadd.xlane.f32.xlu0 %v254
        %v382 = vpop.xlane.xlu0 %381
        %v383 = vmul.f32 %v191, %v191
        %v384 = vmul.f32 %v192, %v192
        %v385 = vmul.f32 %v193, %v193
        %v386 = vmul.f32 %v194, %v194
        %v387 = vmul.f32 %v195, %v195
        %v388 = vmul.f32 %v196, %v196
        %v389 = vmul.f32 %v197, %v197
        %v390 = vmul.f32 %v198, %v198
        %v391 = vmul.f32 %v199, %v199
        %v392 = vmul.f32 %v200, %v200
        %v393 = vmul.f32 %v201, %v201
        %v394 = vmul.f32 %v202, %v202
        %v395 = vmul.f32 %v203, %v203
        %v396 = vmul.f32 %v204, %v204
        %v397 = vmul.f32 %v205, %v205
        %v398 = vmul.f32 %v206, %v206
        %v399 = vmul.f32 %v207, %v207
        %v400 = vmul.f32 %v208, %v208
        %v401 = vmul.f32 %v209, %v209
        %v402 = vmul.f32 %v210, %v210
        %v403 = vmul.f32 %v211, %v211
        %v404 = vmul.f32 %v212, %v212
        %v405 = vmul.f32 %v213, %v213
        %v406 = vmul.f32 %v214, %v214
        %v407 = vmul.f32 %v215, %v215
        %v408 = vmul.f32 %v216, %v216
        %v409 = vmul.f32 %v217, %v217
        %v410 = vmul.f32 %v218, %v218
        %v411 = vmul.f32 %v219, %v219
        %v412 = vmul.f32 %v220, %v220
        %v413 = vmul.f32 %v221, %v221
        %v414 = vmul.f32 %v222, %v222
        %v415 = vmul.f32 %v223, %v223
        %v416 = vmul.f32 %v224, %v224
        %v417 = vmul.f32 %v225, %v225
        %v418 = vmul.f32 %v226, %v226
        %v419 = vmul.f32 %v227, %v227
        %v420 = vmul.f32 %v228, %v228
        %v421 = vmul.f32 %v229, %v229
        %v422 = vmul.f32 %v230, %v230
        %v423 = vmul.f32 %v231, %v231
        %v424 = vmul.f32 %v232, %v232
        %v425 = vmul.f32 %v233, %v233
        %v426 = vmul.f32 %v234, %v234
        %v427 = vmul.f32 %v235, %v235
        %v428 = vmul.f32 %v236, %v236
        %v429 = vmul.f32 %v237, %v237
        %v430 = vmul.f32 %v238, %v238
        %v431 = vmul.f32 %v239, %v239
        %v432 = vmul.f32 %v240, %v240
        %v433 = vmul.f32 %v241, %v241
        %v434 = vmul.f32 %v242, %v242
        %v435 = vmul.f32 %v243, %v243
        %v436 = vmul.f32 %v244, %v244
        %v437 = vmul.f32 %v245, %v245
        %v438 = vmul.f32 %v246, %v246
        %v439 = vmul.f32 %v247, %v247
        %v440 = vmul.f32 %v248, %v248
        %v441 = vmul.f32 %v249, %v249
        %v442 = vmul.f32 %v250, %v250
        %v443 = vmul.f32 %v251, %v251
        %v444 = vmul.f32 %v252, %v252
        %v445 = vmul.f32 %v253, %v253
        %v446 = vmul.f32 %v254, %v254
        %447 = vadd.xlane.f32.xlu0 %v383
        %v448 = vpop.xlane.xlu0 %447
        %449 = vadd.xlane.f32.xlu0 %v384
        %v450 = vpop.xlane.xlu0 %449
        %451 = vadd.xlane.f32.xlu0 %v385
        %v452 = vpop.xlane.xlu0 %451
        %453 = vadd.xlane.f32.xlu0 %v386
        %v454 = vpop.xlane.xlu0 %453
        %455 = vadd.xlane.f32.xlu0 %v387
        %v456 = vpop.xlane.xlu0 %455
        %457 = vadd.xlane.f32.xlu0 %v388
        %v458 = vpop.xlane.xlu0 %457
        %459 = vadd.xlane.f32.xlu0 %v389
        %v460 = vpop.xlane.xlu0 %459
        %461 = vadd.xlane.f32.xlu0 %v390
        %v462 = vpop.xlane.xlu0 %461
        %463 = vadd.xlane.f32.xlu0 %v391
        %v464 = vpop.xlane.xlu0 %463
        %465 = vadd.xlane.f32.xlu0 %v392
        %v466 = vpop.xlane.xlu0 %465
        %467 = vadd.xlane.f32.xlu0 %v393
        %v468 = vpop.xlane.xlu0 %467
        %469 = vadd.xlane.f32.xlu0 %v394
        %v470 = vpop.xlane.xlu0 %469
        %471 = vadd.xlane.f32.xlu0 %v395
        %v472 = vpop.xlane.xlu0 %471
        %473 = vadd.xlane.f32.xlu0 %v396
        %v474 = vpop.xlane.xlu0 %473
        %475 = vadd.xlane.f32.xlu0 %v397
        %v476 = vpop.xlane.xlu0 %475
        %477 = vadd.xlane.f32.xlu0 %v398
        %v478 = vpop.xlane.xlu0 %477
        %479 = vadd.xlane.f32.xlu0 %v399
        %v480 = vpop.xlane.xlu0 %479
        %481 = vadd.xlane.f32.xlu0 %v400
        %v482 = vpop.xlane.xlu0 %481
        %483 = vadd.xlane.f32.xlu0 %v401
        %v484 = vpop.xlane.xlu0 %483
        %485 = vadd.xlane.f32.xlu0 %v402
        %v486 = vpop.xlane.xlu0 %485
        %487 = vadd.xlane.f32.xlu0 %v403
        %v488 = vpop.xlane.xlu0 %487
        %489 = vadd.xlane.f32.xlu0 %v404
        %v490 = vpop.xlane.xlu0 %489
        %491 = vadd.xlane.f32.xlu0 %v405
        %v492 = vpop.xlane.xlu0 %491
        %493 = vadd.xlane.f32.xlu0 %v406
        %v494 = vpop.xlane.xlu0 %493
        %495 = vadd.xlane.f32.xlu0 %v407
        %v496 = vpop.xlane.xlu0 %495
        %497 = vadd.xlane.f32.xlu0 %v408
        %v498 = vpop.xlane.xlu0 %497
        %499 = vadd.xlane.f32.xlu0 %v409
        %v500 = vpop.xlane.xlu0 %499
        %501 = vadd.xlane.f32.xlu0 %v410
        %v502 = vpop.xlane.xlu0 %501
        %503 = vadd.xlane.f32.xlu0 %v411
        %v504 = vpop.xlane.xlu0 %503
        %505 = vadd.xlane.f32.xlu0 %v412
        %v506 = vpop.xlane.xlu0 %505
        %507 = vadd.xlane.f32.xlu0 %v413
        %v508 = vpop.xlane.xlu0 %507
        %509 = vadd.xlane.f32.xlu0 %v414
        %v510 = vpop.xlane.xlu0 %509
        %511 = vadd.xlane.f32.xlu0 %v415
        %v512 = vpop.xlane.xlu0 %511
        %513 = vadd.xlane.f32.xlu0 %v416
        %v514 = vpop.xlane.xlu0 %513
        %515 = vadd.xlane.f32.xlu0 %v417
        %v516 = vpop.xlane.xlu0 %515
        %517 = vadd.xlane.f32.xlu0 %v418
        %v518 = vpop.xlane.xlu0 %517
        %519 = vadd.xlane.f32.xlu0 %v419
        %v520 = vpop.xlane.xlu0 %519
        %521 = vadd.xlane.f32.xlu0 %v420
        %v522 = vpop.xlane.xlu0 %521
        %523 = vadd.xlane.f32.xlu0 %v421
        %v524 = vpop.xlane.xlu0 %523
        %525 = vadd.xlane.f32.xlu0 %v422
        %v526 = vpop.xlane.xlu0 %525
        %527 = vadd.xlane.f32.xlu0 %v423
        %v528 = vpop.xlane.xlu0 %527
        %529 = vadd.xlane.f32.xlu0 %v424
        %v530 = vpop.xlane.xlu0 %529
        %531 = vadd.xlane.f32.xlu0 %v425
        %v532 = vpop.xlane.xlu0 %531
        %533 = vadd.xlane.f32.xlu0 %v426
        %v534 = vpop.xlane.xlu0 %533
        %535 = vadd.xlane.f32.xlu0 %v427
        %v536 = vpop.xlane.xlu0 %535
        %537 = vadd.xlane.f32.xlu0 %v428
        %v538 = vpop.xlane.xlu0 %537
        %539 = vadd.xlane.f32.xlu0 %v429
        %v540 = vpop.xlane.xlu0 %539
        %541 = vadd.xlane.f32.xlu0 %v430
        %v542 = vpop.xlane.xlu0 %541
        %543 = vadd.xlane.f32.xlu0 %v431
        %v544 = vpop.xlane.xlu0 %543
        %545 = vadd.xlane.f32.xlu0 %v432
        %v546 = vpop.xlane.xlu0 %545
        %547 = vadd.xlane.f32.xlu0 %v433
        %v548 = vpop.xlane.xlu0 %547
        %549 = vadd.xlane.f32.xlu0 %v434
        %v550 = vpop.xlane.xlu0 %549
        %551 = vadd.xlane.f32.xlu0 %v435
        %v552 = vpop.xlane.xlu0 %551
        %553 = vadd.xlane.f32.xlu0 %v436
        %v554 = vpop.xlane.xlu0 %553
        %555 = vadd.xlane.f32.xlu0 %v437
        %v556 = vpop.xlane.xlu0 %555
        %557 = vadd.xlane.f32.xlu0 %v438
        %v558 = vpop.xlane.xlu0 %557
        %559 = vadd.xlane.f32.xlu0 %v439
        %v560 = vpop.xlane.xlu0 %559
        %561 = vadd.xlane.f32.xlu0 %v440
        %v562 = vpop.xlane.xlu0 %561
        %563 = vadd.xlane.f32.xlu0 %v441
        %v564 = vpop.xlane.xlu0 %563
        %565 = vadd.xlane.f32.xlu0 %v442
        %v566 = vpop.xlane.xlu0 %565
        %567 = vadd.xlane.f32.xlu0 %v443
        %v568 = vpop.xlane.xlu0 %567
        %569 = vadd.xlane.f32.xlu0 %v444
        %v570 = vpop.xlane.xlu0 %569
        %571 = vadd.xlane.f32.xlu0 %v445
        %v572 = vpop.xlane.xlu0 %571
        %573 = vadd.xlane.f32.xlu0 %v446
        %v574 = vpop.xlane.xlu0 %573
        %v575 = vmul.f32 %v256, 0.0078125
        %v576 = vmul.f32 %v258, 0.0078125
        %v577 = vmul.f32 %v260, 0.0078125
        %v578 = vmul.f32 %v262, 0.0078125
        %v579 = vmul.f32 %v264, 0.0078125
        %v580 = vmul.f32 %v266, 0.0078125
        %v581 = vmul.f32 %v268, 0.0078125
        %v582 = vmul.f32 %v270, 0.0078125
        %v583 = vmul.f32 %v272, 0.0078125
        %v584 = vmul.f32 %v274, 0.0078125
        %v585 = vmul.f32 %v276, 0.0078125
        %v586 = vmul.f32 %v278, 0.0078125
        %v587 = vmul.f32 %v280, 0.0078125
        %v588 = vmul.f32 %v282, 0.0078125
        %v589 = vmul.f32 %v284, 0.0078125
        %v590 = vmul.f32 %v286, 0.0078125
        %v591 = vmul.f32 %v288, 0.0078125
        %v592 = vmul.f32 %v290, 0.0078125
        %v593 = vmul.f32 %v292, 0.0078125
        %v594 = vmul.f32 %v294, 0.0078125
        %v595 = vmul.f32 %v296, 0.0078125
        %v596 = vmul.f32 %v298, 0.0078125
        %v597 = vmul.f32 %v300, 0.0078125
        %v598 = vmul.f32 %v302, 0.0078125
        %v599 = vmul.f32 %v304, 0.0078125
        %v600 = vmul.f32 %v306, 0.0078125
        %v601 = vmul.f32 %v308, 0.0078125
        %v602 = vmul.f32 %v310, 0.0078125
        %v603 = vmul.f32 %v312, 0.0078125
        %v604 = vmul.f32 %v314, 0.0078125
        %v605 = vmul.f32 %v316, 0.0078125
        %v606 = vmul.f32 %v318, 0.0078125
        %v607 = vmul.f32 %v320, 0.0078125
        %v608 = vmul.f32 %v322, 0.0078125
        %v609 = vmul.f32 %v324, 0.0078125
        %v610 = vmul.f32 %v326, 0.0078125
        %v611 = vmul.f32 %v328, 0.0078125
        %v612 = vmul.f32 %v330, 0.0078125
        %v613 = vmul.f32 %v332, 0.0078125
        %v614 = vmul.f32 %v334, 0.0078125
        %v615 = vmul.f32 %v336, 0.0078125
        %v616 = vmul.f32 %v338, 0.0078125
        %v617 = vmul.f32 %v340, 0.0078125
        %v618 = vmul.f32 %v342, 0.0078125
        %v619 = vmul.f32 %v344, 0.0078125
        %v620 = vmul.f32 %v346, 0.0078125
        %v621 = vmul.f32 %v348, 0.0078125
        %v622 = vmul.f32 %v350, 0.0078125
        %v623 = vmul.f32 %v352, 0.0078125
        %v624 = vmul.f32 %v354, 0.0078125
        %v625 = vmul.f32 %v356, 0.0078125
        %v626 = vmul.f32 %v358, 0.0078125
        %v627 = vmul.f32 %v360, 0.0078125
        %v628 = vmul.f32 %v362, 0.0078125
        %v629 = vmul.f32 %v364, 0.0078125
        %v630 = vmul.f32 %v366, 0.0078125
        %v631 = vmul.f32 %v368, 0.0078125
        %v632 = vmul.f32 %v370, 0.0078125
        %v633 = vmul.f32 %v372, 0.0078125
        %v634 = vmul.f32 %v374, 0.0078125
        %v635 = vmul.f32 %v376, 0.0078125
        %v636 = vmul.f32 %v378, 0.0078125
        %v637 = vmul.f32 %v380, 0.0078125
        %v638 = vmul.f32 %v382, 0.0078125
        %v639 = vmul.f32 %v448, 0.0078125
        %v640 = vmul.f32 %v450, 0.0078125
        %v641 = vmul.f32 %v452, 0.0078125
        %v642 = vmul.f32 %v454, 0.0078125
        %v643 = vmul.f32 %v456, 0.0078125
        %v644 = vmul.f32 %v458, 0.0078125
        %v645 = vmul.f32 %v460, 0.0078125
        %v646 = vmul.f32 %v462, 0.0078125
        %v647 = vmul.f32 %v464, 0.0078125
        %v648 = vmul.f32 %v466, 0.0078125
        %v649 = vmul.f32 %v468, 0.0078125
        %v650 = vmul.f32 %v470, 0.0078125
        %v651 = vmul.f32 %v472, 0.0078125
        %v652 = vmul.f32 %v474, 0.0078125
        %v653 = vmul.f32 %v476, 0.0078125
        %v654 = vmul.f32 %v478, 0.0078125
        %v655 = vmul.f32 %v480, 0.0078125
        %v656 = vmul.f32 %v482, 0.0078125
        %v657 = vmul.f32 %v484, 0.0078125
        %v658 = vmul.f32 %v486, 0.0078125
        %v659 = vmul.f32 %v488, 0.0078125
        %v660 = vmul.f32 %v490, 0.0078125
        %v661 = vmul.f32 %v492, 0.0078125
        %v662 = vmul.f32 %v494, 0.0078125
        %v663 = vmul.f32 %v496, 0.0078125
        %v664 = vmul.f32 %v498, 0.0078125
        %v665 = vmul.f32 %v500, 0.0078125
        %v666 = vmul.f32 %v502, 0.0078125
        %v667 = vmul.f32 %v504, 0.0078125
        %v668 = vmul.f32 %v506, 0.0078125
        %v669 = vmul.f32 %v508, 0.0078125
        %v670 = vmul.f32 %v510, 0.0078125
        %v671 = vmul.f32 %v512, 0.0078125
        %v672 = vmul.f32 %v514, 0.0078125
        %v673 = vmul.f32 %v516, 0.0078125
        %v674 = vmul.f32 %v518, 0.0078125
        %v675 = vmul.f32 %v520, 0.0078125
        %v676 = vmul.f32 %v522, 0.0078125
        %v677 = vmul.f32 %v524, 0.0078125
        %v678 = vmul.f32 %v526, 0.0078125
        %v679 = vmul.f32 %v528, 0.0078125
        %v680 = vmul.f32 %v530, 0.0078125
        %v681 = vmul.f32 %v532, 0.0078125
        %v682 = vmul.f32 %v534, 0.0078125
        %v683 = vmul.f32 %v536, 0.0078125
        %v684 = vmul.f32 %v538, 0.0078125
        %v685 = vmul.f32 %v540, 0.0078125
        %v686 = vmul.f32 %v542, 0.0078125
        %v687 = vmul.f32 %v544, 0.0078125
        %v688 = vmul.f32 %v546, 0.0078125
        %v689 = vmul.f32 %v548, 0.0078125
        %v690 = vmul.f32 %v550, 0.0078125
        %v691 = vmul.f32 %v552, 0.0078125
        %v692 = vmul.f32 %v554, 0.0078125
        %v693 = vmul.f32 %v556, 0.0078125
        %v694 = vmul.f32 %v558, 0.0078125
        %v695 = vmul.f32 %v560, 0.0078125
        %v696 = vmul.f32 %v562, 0.0078125
        %v697 = vmul.f32 %v564, 0.0078125
        %v698 = vmul.f32 %v566, 0.0078125
        %v699 = vmul.f32 %v568, 0.0078125
        %v700 = vmul.f32 %v570, 0.0078125
        %v701 = vmul.f32 %v572, 0.0078125
        %v702 = vmul.f32 %v574, 0.0078125
        %v703 = vmul.f32 %v575, %v575
        %v704 = vmul.f32 %v576, %v576
        %v705 = vmul.f32 %v577, %v577
        %v706 = vmul.f32 %v578, %v578
        %v707 = vmul.f32 %v579, %v579
        %v708 = vmul.f32 %v580, %v580
        %v709 = vmul.f32 %v581, %v581
        %v710 = vmul.f32 %v582, %v582
        %v711 = vmul.f32 %v583, %v583
        %v712 = vmul.f32 %v584, %v584
        %v713 = vmul.f32 %v585, %v585
        %v714 = vmul.f32 %v586, %v586
        %v715 = vmul.f32 %v587, %v587
        %v716 = vmul.f32 %v588, %v588
        %v717 = vmul.f32 %v589, %v589
        %v718 = vmul.f32 %v590, %v590
        %v719 = vmul.f32 %v591, %v591
        %v720 = vmul.f32 %v592, %v592
        %v721 = vmul.f32 %v593, %v593
        %v722 = vmul.f32 %v594, %v594
        %v723 = vmul.f32 %v595, %v595
        %v724 = vmul.f32 %v596, %v596
        %v725 = vmul.f32 %v597, %v597
        %v726 = vmul.f32 %v598, %v598
        %v727 = vmul.f32 %v599, %v599
        %v728 = vmul.f32 %v600, %v600
        %v729 = vmul.f32 %v601, %v601
        %v730 = vmul.f32 %v602, %v602
        %v731 = vmul.f32 %v603, %v603
        %v732 = vmul.f32 %v604, %v604
        %v733 = vmul.f32 %v605, %v605
        %v734 = vmul.f32 %v606, %v606
        %v735 = vmul.f32 %v607, %v607
        %v736 = vmul.f32 %v608, %v608
        %v737 = vmul.f32 %v609, %v609
        %v738 = vmul.f32 %v610, %v610
        %v739 = vmul.f32 %v611, %v611
        %v740 = vmul.f32 %v612, %v612
        %v741 = vmul.f32 %v613, %v613
        %v742 = vmul.f32 %v614, %v614
        %v743 = vmul.f32 %v615, %v615
        %v744 = vmul.f32 %v616, %v616
        %v745 = vmul.f32 %v617, %v617
        %v746 = vmul.f32 %v618, %v618
        %v747 = vmul.f32 %v619, %v619
        %v748 = vmul.f32 %v620, %v620
        %v749 = vmul.f32 %v621, %v621
        %v750 = vmul.f32 %v622, %v622
        %v751 = vmul.f32 %v623, %v623
        %v752 = vmul.f32 %v624, %v624
        %v753 = vmul.f32 %v625, %v625
        %v754 = vmul.f32 %v626, %v626
        %v755 = vmul.f32 %v627, %v627
        %v756 = vmul.f32 %v628, %v628
        %v757 = vmul.f32 %v629, %v629
        %v758 = vmul.f32 %v630, %v630
        %v759 = vmul.f32 %v631, %v631
        %v760 = vmul.f32 %v632, %v632
        %v761 = vmul.f32 %v633, %v633
        %v762 = vmul.f32 %v634, %v634
        %v763 = vmul.f32 %v635, %v635
        %v764 = vmul.f32 %v636, %v636
        %v765 = vmul.f32 %v637, %v637
        %v766 = vmul.f32 %v638, %v638
        %v767 = vsub.f32 %v639, %v703
        %v768 = vsub.f32 %v640, %v704
        %v769 = vsub.f32 %v641, %v705
        %v770 = vsub.f32 %v642, %v706
        %v771 = vsub.f32 %v643, %v707
        %v772 = vsub.f32 %v644, %v708
        %v773 = vsub.f32 %v645, %v709
        %v774 = vsub.f32 %v646, %v710
        %v775 = vsub.f32 %v647, %v711
        %v776 = vsub.f32 %v648, %v712
        %v777 = vsub.f32 %v649, %v713
        %v778 = vsub.f32 %v650, %v714
        %v779 = vsub.f32 %v651, %v715
        %v780 = vsub.f32 %v652, %v716
        %v781 = vsub.f32 %v653, %v717
        %v782 = vsub.f32 %v654, %v718
        %v783 = vsub.f32 %v655, %v719
        %v784 = vsub.f32 %v656, %v720
        %v785 = vsub.f32 %v657, %v721
        %v786 = vsub.f32 %v658, %v722
        %v787 = vsub.f32 %v659, %v723
        %v788 = vsub.f32 %v660, %v724
        %v789 = vsub.f32 %v661, %v725
        %v790 = vsub.f32 %v662, %v726
        %v791 = vsub.f32 %v663, %v727
        %v792 = vsub.f32 %v664, %v728
        %v793 = vsub.f32 %v665, %v729
        %v794 = vsub.f32 %v666, %v730
        %v795 = vsub.f32 %v667, %v731
        %v796 = vsub.f32 %v668, %v732
        %v797 = vsub.f32 %v669, %v733
        %v798 = vsub.f32 %v670, %v734
        %v799 = vsub.f32 %v671, %v735
        %v800 = vsub.f32 %v672, %v736
        %v801 = vsub.f32 %v673, %v737
        %v802 = vsub.f32 %v674, %v738
        %v803 = vsub.f32 %v675, %v739
        %v804 = vsub.f32 %v676, %v740
        %v805 = vsub.f32 %v677, %v741
        %v806 = vsub.f32 %v678, %v742
        %v807 = vsub.f32 %v679, %v743
        %v808 = vsub.f32 %v680, %v744
        %v809 = vsub.f32 %v681, %v745
        %v810 = vsub.f32 %v682, %v746
        %v811 = vsub.f32 %v683, %v747
        %v812 = vsub.f32 %v684, %v748
        %v813 = vsub.f32 %v685, %v749
        %v814 = vsub.f32 %v686, %v750
        %v815 = vsub.f32 %v687, %v751
        %v816 = vsub.f32 %v688, %v752
        %v817 = vsub.f32 %v689, %v753
        %v818 = vsub.f32 %v690, %v754
        %v819 = vsub.f32 %v691, %v755
        %v820 = vsub.f32 %v692, %v756
        %v821 = vsub.f32 %v693, %v757
        %v822 = vsub.f32 %v694, %v758
        %v823 = vsub.f32 %v695, %v759
        %v824 = vsub.f32 %v696, %v760
        %v825 = vsub.f32 %v697, %v761
        %v826 = vsub.f32 %v698, %v762
        %v827 = vsub.f32 %v699, %v763
        %v828 = vsub.f32 %v700, %v764
        %v829 = vsub.f32 %v701, %v765
        %v830 = vsub.f32 %v702, %v766
        %v831 = vadd.f32 %v767, 1e-05
        %v832 = vadd.f32 %v768, 1e-05
        %v833 = vadd.f32 %v769, 1e-05
        %v834 = vadd.f32 %v770, 1e-05
        %v835 = vadd.f32 %v771, 1e-05
        %v836 = vadd.f32 %v772, 1e-05
        %v837 = vadd.f32 %v773, 1e-05
        %v838 = vadd.f32 %v774, 1e-05
        %v839 = vadd.f32 %v775, 1e-05
        %v840 = vadd.f32 %v776, 1e-05
        %v841 = vadd.f32 %v777, 1e-05
        %v842 = vadd.f32 %v778, 1e-05
        %v843 = vadd.f32 %v779, 1e-05
        %v844 = vadd.f32 %v780, 1e-05
        %v845 = vadd.f32 %v781, 1e-05
        %v846 = vadd.f32 %v782, 1e-05
        %v847 = vadd.f32 %v783, 1e-05
        %v848 = vadd.f32 %v784, 1e-05
        %v849 = vadd.f32 %v785, 1e-05
        %v850 = vadd.f32 %v786, 1e-05
        %v851 = vadd.f32 %v787, 1e-05
        %v852 = vadd.f32 %v788, 1e-05
        %v853 = vadd.f32 %v789, 1e-05
        %v854 = vadd.f32 %v790, 1e-05
        %v855 = vadd.f32 %v791, 1e-05
        %v856 = vadd.f32 %v792, 1e-05
        %v857 = vadd.f32 %v793, 1e-05
        %v858 = vadd.f32 %v794, 1e-05
        %v859 = vadd.f32 %v795, 1e-05
        %v860 = vadd.f32 %v796, 1e-05
        %v861 = vadd.f32 %v797, 1e-05
        %v862 = vadd.f32 %v798, 1e-05
        %v863 = vadd.f32 %v799, 1e-05
        %v864 = vadd.f32 %v800, 1e-05
        %v865 = vadd.f32 %v801, 1e-05
        %v866 = vadd.f32 %v802, 1e-05
        %v867 = vadd.f32 %v803, 1e-05
        %v868 = vadd.f32 %v804, 1e-05
        %v869 = vadd.f32 %v805, 1e-05
        %v870 = vadd.f32 %v806, 1e-05
        %v871 = vadd.f32 %v807, 1e-05
        %v872 = vadd.f32 %v808, 1e-05
        %v873 = vadd.f32 %v809, 1e-05
        %v874 = vadd.f32 %v810, 1e-05
        %v875 = vadd.f32 %v811, 1e-05
        %v876 = vadd.f32 %v812, 1e-05
        %v877 = vadd.f32 %v813, 1e-05
        %v878 = vadd.f32 %v814, 1e-05
        %v879 = vadd.f32 %v815, 1e-05
        %v880 = vadd.f32 %v816, 1e-05
        %v881 = vadd.f32 %v817, 1e-05
        %v882 = vadd.f32 %v818, 1e-05
        %v883 = vadd.f32 %v819, 1e-05
        %v884 = vadd.f32 %v820, 1e-05
        %v885 = vadd.f32 %v821, 1e-05
        %v886 = vadd.f32 %v822, 1e-05
        %v887 = vadd.f32 %v823, 1e-05
        %v888 = vadd.f32 %v824, 1e-05
        %v889 = vadd.f32 %v825, 1e-05
        %v890 = vadd.f32 %v826, 1e-05
        %v891 = vadd.f32 %v827, 1e-05
        %v892 = vadd.f32 %v828, 1e-05
        %v893 = vadd.f32 %v829, 1e-05
        %v894 = vadd.f32 %v830, 1e-05
        %v895 = vrsqrt.pop %v831
        %v896 = vrsqrt.pop %v832
        %v897 = vrsqrt.pop %v833
        %v898 = vrsqrt.pop %v834
        %v899 = vrsqrt.pop %v835
        %v900 = vrsqrt.pop %v836
        %v901 = vrsqrt.pop %v837
        %v902 = vrsqrt.pop %v838
        %v903 = vrsqrt.pop %v839
        %v904 = vrsqrt.pop %v840
        %v905 = vrsqrt.pop %v841
        %v906 = vrsqrt.pop %v842
        %v907 = vrsqrt.pop %v843
        %v908 = vrsqrt.pop %v844
        %v909 = vrsqrt.pop %v845
        %v910 = vrsqrt.pop %v846
        %v911 = vrsqrt.pop %v847
        %v912 = vrsqrt.pop %v848
        %v913 = vrsqrt.pop %v849
        %v914 = vrsqrt.pop %v850
        %v915 = vrsqrt.pop %v851
        %v916 = vrsqrt.pop %v852
        %v917 = vrsqrt.pop %v853
        %v918 = vrsqrt.pop %v854
        %v919 = vrsqrt.pop %v855
        %v920 = vrsqrt.pop %v856
        %v921 = vrsqrt.pop %v857
        %v922 = vrsqrt.pop %v858
        %v923 = vrsqrt.pop %v859
        %v924 = vrsqrt.pop %v860
        %v925 = vrsqrt.pop %v861
        %v926 = vrsqrt.pop %v862
        %v927 = vrsqrt.pop %v863
        %v928 = vrsqrt.pop %v864
        %v929 = vrsqrt.pop %v865
        %v930 = vrsqrt.pop %v866
        %v931 = vrsqrt.pop %v867
        %v932 = vrsqrt.pop %v868
        %v933 = vrsqrt.pop %v869
        %v934 = vrsqrt.pop %v870
        %v935 = vrsqrt.pop %v871
        %v936 = vrsqrt.pop %v872
        %v937 = vrsqrt.pop %v873
        %v938 = vrsqrt.pop %v874
        %v939 = vrsqrt.pop %v875
        %v940 = vrsqrt.pop %v876
        %v941 = vrsqrt.pop %v877
        %v942 = vrsqrt.pop %v878
        %v943 = vrsqrt.pop %v879
        %v944 = vrsqrt.pop %v880
        %v945 = vrsqrt.pop %v881
        %v946 = vrsqrt.pop %v882
        %v947 = vrsqrt.pop %v883
        %v948 = vrsqrt.pop %v884
        %v949 = vrsqrt.pop %v885
        %v950 = vrsqrt.pop %v886
        %v951 = vrsqrt.pop %v887
        %v952 = vrsqrt.pop %v888
        %v953 = vrsqrt.pop %v889
        %v954 = vrsqrt.pop %v890
        %v955 = vrsqrt.pop %v891
        %v956 = vrsqrt.pop %v892
        %v957 = vrsqrt.pop %v893
        %v958 = vrsqrt.pop %v894
        %v959 = vsub.f32 %v191, %v575
        %v960 = vsub.f32 %v192, %v576
        %v961 = vsub.f32 %v193, %v577
        %v962 = vsub.f32 %v194, %v578
        %v963 = vsub.f32 %v195, %v579
        %v964 = vsub.f32 %v196, %v580
        %v965 = vsub.f32 %v197, %v581
        %v966 = vsub.f32 %v198, %v582
        %v967 = vsub.f32 %v199, %v583
        %v968 = vsub.f32 %v200, %v584
        %v969 = vsub.f32 %v201, %v585
        %v970 = vsub.f32 %v202, %v586
        %v971 = vsub.f32 %v203, %v587
        %v972 = vsub.f32 %v204, %v588
        %v973 = vsub.f32 %v205, %v589
        %v974 = vsub.f32 %v206, %v590
        %v975 = vsub.f32 %v207, %v591
        %v976 = vsub.f32 %v208, %v592
        %v977 = vsub.f32 %v209, %v593
        %v978 = vsub.f32 %v210, %v594
        %v979 = vsub.f32 %v211, %v595
        %v980 = vsub.f32 %v212, %v596
        %v981 = vsub.f32 %v213, %v597
        %v982 = vsub.f32 %v214, %v598
        %v983 = vsub.f32 %v215, %v599
        %v984 = vsub.f32 %v216, %v600
        %v985 = vsub.f32 %v217, %v601
        %v986 = vsub.f32 %v218, %v602
        %v987 = vsub.f32 %v219, %v603
        %v988 = vsub.f32 %v220, %v604
        %v989 = vsub.f32 %v221, %v605
        %v990 = vsub.f32 %v222, %v606
        %v991 = vsub.f32 %v223, %v607
        %v992 = vsub.f32 %v224, %v608
        %v993 = vsub.f32 %v225, %v609
        %v994 = vsub.f32 %v226, %v610
        %v995 = vsub.f32 %v227, %v611
        %v996 = vsub.f32 %v228, %v612
        %v997 = vsub.f32 %v229, %v613
        %v998 = vsub.f32 %v230, %v614
        %v999 = vsub.f32 %v231, %v615
        %v1000 = vsub.f32 %v232, %v616
        %v1001 = vsub.f32 %v233, %v617
        %v1002 = vsub.f32 %v234, %v618
        %v1003 = vsub.f32 %v235, %v619
        %v1004 = vsub.f32 %v236, %v620
        %v1005 = vsub.f32 %v237, %v621
        %v1006 = vsub.f32 %v238, %v622
        %v1007 = vsub.f32 %v239, %v623
        %v1008 = vsub.f32 %v240, %v624
        %v1009 = vsub.f32 %v241, %v625
        %v1010 = vsub.f32 %v242, %v626
        %v1011 = vsub.f32 %v243, %v627
        %v1012 = vsub.f32 %v244, %v628
        %v1013 = vsub.f32 %v245, %v629
        %v1014 = vsub.f32 %v246, %v630
        %v1015 = vsub.f32 %v247, %v631
        %v1016 = vsub.f32 %v248, %v632
        %v1017 = vsub.f32 %v249, %v633
        %v1018 = vsub.f32 %v250, %v634
        %v1019 = vsub.f32 %v251, %v635
        %v1020 = vsub.f32 %v252, %v636
        %v1021 = vsub.f32 %v253, %v637
        %v1022 = vsub.f32 %v254, %v638
        %v1023 = vmul.f32 %v959, %v895
        %v1024 = vmul.f32 %v960, %v896
        %v1025 = vmul.f32 %v961, %v897
        %v1026 = vmul.f32 %v962, %v898
        %v1027 = vmul.f32 %v963, %v899
        %v1028 = vmul.f32 %v964, %v900
        %v1029 = vmul.f32 %v965, %v901
        %v1030 = vmul.f32 %v966, %v902
        %v1031 = vmul.f32 %v967, %v903
        %v1032 = vmul.f32 %v968, %v904
        %v1033 = vmul.f32 %v969, %v905
        %v1034 = vmul.f32 %v970, %v906
        %v1035 = vmul.f32 %v971, %v907
        %v1036 = vmul.f32 %v972, %v908
        %v1037 = vmul.f32 %v973, %v909
        %v1038 = vmul.f32 %v974, %v910
        %v1039 = vmul.f32 %v975, %v911
        %v1040 = vmul.f32 %v976, %v912
        %v1041 = vmul.f32 %v977, %v913
        %v1042 = vmul.f32 %v978, %v914
        %v1043 = vmul.f32 %v979, %v915
        %v1044 = vmul.f32 %v980, %v916
        %v1045 = vmul.f32 %v981, %v917
        %v1046 = vmul.f32 %v982, %v918
        %v1047 = vmul.f32 %v983, %v919
        %v1048 = vmul.f32 %v984, %v920
        %v1049 = vmul.f32 %v985, %v921
        %v1050 = vmul.f32 %v986, %v922
        %v1051 = vmul.f32 %v987, %v923
        %v1052 = vmul.f32 %v988, %v924
        %v1053 = vmul.f32 %v989, %v925
        %v1054 = vmul.f32 %v990, %v926
        %v1055 = vmul.f32 %v991, %v927
        %v1056 = vmul.f32 %v992, %v928
        %v1057 = vmul.f32 %v993, %v929
        %v1058 = vmul.f32 %v994, %v930
        %v1059 = vmul.f32 %v995, %v931
        %v1060 = vmul.f32 %v996, %v932
        %v1061 = vmul.f32 %v997, %v933
        %v1062 = vmul.f32 %v998, %v934
        %v1063 = vmul.f32 %v999, %v935
        %v1064 = vmul.f32 %v1000, %v936
        %v1065 = vmul.f32 %v1001, %v937
        %v1066 = vmul.f32 %v1002, %v938
        %v1067 = vmul.f32 %v1003, %v939
        %v1068 = vmul.f32 %v1004, %v940
        %v1069 = vmul.f32 %v1005, %v941
        %v1070 = vmul.f32 %v1006, %v942
        %v1071 = vmul.f32 %v1007, %v943
        %v1072 = vmul.f32 %v1008, %v944
        %v1073 = vmul.f32 %v1009, %v945
        %v1074 = vmul.f32 %v1010, %v946
        %v1075 = vmul.f32 %v1011, %v947
        %v1076 = vmul.f32 %v1012, %v948
        %v1077 = vmul.f32 %v1013, %v949
        %v1078 = vmul.f32 %v1014, %v950
        %v1079 = vmul.f32 %v1015, %v951
        %v1080 = vmul.f32 %v1016, %v952
        %v1081 = vmul.f32 %v1017, %v953
        %v1082 = vmul.f32 %v1018, %v954
        %v1083 = vmul.f32 %v1019, %v955
        %v1084 = vmul.f32 %v1020, %v956
        %v1085 = vmul.f32 %v1021, %v957
        %v1086 = vmul.f32 %v1022, %v958
        %v1087 = vld [vmem:[%s1] sm:$0x1]
        %v1089 = vlaneseq
        %v1090 = vshrl.u32 %v1089, 7
        %v1091 = vsub.s32 0, %v1090
        %v1092 = vrot.slane %v1087, %v1091
        %v1094 = vmul.f32 %v1023, %v1092
        %v1095 = vmul.f32 %v1024, %v1092
        %v1096 = vmul.f32 %v1025, %v1092
        %v1097 = vmul.f32 %v1026, %v1092
        %v1098 = vmul.f32 %v1027, %v1092
        %v1099 = vmul.f32 %v1028, %v1092
        %v1100 = vmul.f32 %v1029, %v1092
        %v1101 = vmul.f32 %v1030, %v1092
        %v1102 = vmul.f32 %v1031, %v1092
        %v1103 = vmul.f32 %v1032, %v1092
        %v1104 = vmul.f32 %v1033, %v1092
        %v1105 = vmul.f32 %v1034, %v1092
        %v1106 = vmul.f32 %v1035, %v1092
        %v1107 = vmul.f32 %v1036, %v1092
        %v1108 = vmul.f32 %v1037, %v1092
        %v1109 = vmul.f32 %v1038, %v1092
        %v1110 = vmul.f32 %v1039, %v1092
        %v1111 = vmul.f32 %v1040, %v1092
        %v1112 = vmul.f32 %v1041, %v1092
        %v1113 = vmul.f32 %v1042, %v1092
        %v1114 = vmul.f32 %v1043, %v1092
        %v1115 = vmul.f32 %v1044, %v1092
        %v1116 = vmul.f32 %v1045, %v1092
        %v1117 = vmul.f32 %v1046, %v1092
        %v1118 = vmul.f32 %v1047, %v1092
        %v1119 = vmul.f32 %v1048, %v1092
        %v1120 = vmul.f32 %v1049, %v1092
        %v1121 = vmul.f32 %v1050, %v1092
        %v1122 = vmul.f32 %v1051, %v1092
        %v1123 = vmul.f32 %v1052, %v1092
        %v1124 = vmul.f32 %v1053, %v1092
        %v1125 = vmul.f32 %v1054, %v1092
        %v1126 = vmul.f32 %v1055, %v1092
        %v1127 = vmul.f32 %v1056, %v1092
        %v1128 = vmul.f32 %v1057, %v1092
        %v1129 = vmul.f32 %v1058, %v1092
        %v1130 = vmul.f32 %v1059, %v1092
        %v1131 = vmul.f32 %v1060, %v1092
        %v1132 = vmul.f32 %v1061, %v1092
        %v1133 = vmul.f32 %v1062, %v1092
        %v1134 = vmul.f32 %v1063, %v1092
        %v1135 = vmul.f32 %v1064, %v1092
        %v1136 = vmul.f32 %v1065, %v1092
        %v1137 = vmul.f32 %v1066, %v1092
        %v1138 = vmul.f32 %v1067, %v1092
        %v1139 = vmul.f32 %v1068, %v1092
        %v1140 = vmul.f32 %v1069, %v1092
        %v1141 = vmul.f32 %v1070, %v1092
        %v1142 = vmul.f32 %v1071, %v1092
        %v1143 = vmul.f32 %v1072, %v1092
        %v1144 = vmul.f32 %v1073, %v1092
        %v1145 = vmul.f32 %v1074, %v1092
        %v1146 = vmul.f32 %v1075, %v1092
        %v1147 = vmul.f32 %v1076, %v1092
        %v1148 = vmul.f32 %v1077, %v1092
        %v1149 = vmul.f32 %v1078, %v1092
        %v1150 = vmul.f32 %v1079, %v1092
        %v1151 = vmul.f32 %v1080, %v1092
        %v1152 = vmul.f32 %v1081, %v1092
        %v1153 = vmul.f32 %v1082, %v1092
        %v1154 = vmul.f32 %v1083, %v1092
        %v1155 = vmul.f32 %v1084, %v1092
        %v1156 = vmul.f32 %v1085, %v1092
        %v1157 = vmul.f32 %v1086, %v1092
        %v1158 = vld [vmem:[%s2] sm:$0x1]
        %v1160 = vlaneseq
        %v1161 = vshrl.u32 %v1160, 7
        %v1162 = vsub.s32 0, %v1161
        %v1163 = vrot.slane %v1158, %v1162
        %v1165 = vadd.f32 %v1094, %v1163
        %v1166 = vadd.f32 %v1095, %v1163
        %v1167 = vadd.f32 %v1096, %v1163
        %v1168 = vadd.f32 %v1097, %v1163
        %v1169 = vadd.f32 %v1098, %v1163
        %v1170 = vadd.f32 %v1099, %v1163
        %v1171 = vadd.f32 %v1100, %v1163
        %v1172 = vadd.f32 %v1101, %v1163
        %v1173 = vadd.f32 %v1102, %v1163
        %v1174 = vadd.f32 %v1103, %v1163
        %v1175 = vadd.f32 %v1104, %v1163
        %v1176 = vadd.f32 %v1105, %v1163
        %v1177 = vadd.f32 %v1106, %v1163
        %v1178 = vadd.f32 %v1107, %v1163
        %v1179 = vadd.f32 %v1108, %v1163
        %v1180 = vadd.f32 %v1109, %v1163
        %v1181 = vadd.f32 %v1110, %v1163
        %v1182 = vadd.f32 %v1111, %v1163
        %v1183 = vadd.f32 %v1112, %v1163
        %v1184 = vadd.f32 %v1113, %v1163
        %v1185 = vadd.f32 %v1114, %v1163
        %v1186 = vadd.f32 %v1115, %v1163
        %v1187 = vadd.f32 %v1116, %v1163
        %v1188 = vadd.f32 %v1117, %v1163
        %v1189 = vadd.f32 %v1118, %v1163
        %v1190 = vadd.f32 %v1119, %v1163
        %v1191 = vadd.f32 %v1120, %v1163
        %v1192 = vadd.f32 %v1121, %v1163
        %v1193 = vadd.f32 %v1122, %v1163
        %v1194 = vadd.f32 %v1123, %v1163
        %v1195 = vadd.f32 %v1124, %v1163
        %v1196 = vadd.f32 %v1125, %v1163
        %v1197 = vadd.f32 %v1126, %v1163
        %v1198 = vadd.f32 %v1127, %v1163
        %v1199 = vadd.f32 %v1128, %v1163
        %v1200 = vadd.f32 %v1129, %v1163
        %v1201 = vadd.f32 %v1130, %v1163
        %v1202 = vadd.f32 %v1131, %v1163
        %v1203 = vadd.f32 %v1132, %v1163
        %v1204 = vadd.f32 %v1133, %v1163
        %v1205 = vadd.f32 %v1134, %v1163
        %v1206 = vadd.f32 %v1135, %v1163
        %v1207 = vadd.f32 %v1136, %v1163
        %v1208 = vadd.f32 %v1137, %v1163
        %v1209 = vadd.f32 %v1138, %v1163
        %v1210 = vadd.f32 %v1139, %v1163
        %v1211 = vadd.f32 %v1140, %v1163
        %v1212 = vadd.f32 %v1141, %v1163
        %v1213 = vadd.f32 %v1142, %v1163
        %v1214 = vadd.f32 %v1143, %v1163
        %v1215 = vadd.f32 %v1144, %v1163
        %v1216 = vadd.f32 %v1145, %v1163
        %v1217 = vadd.f32 %v1146, %v1163
        %v1218 = vadd.f32 %v1147, %v1163
        %v1219 = vadd.f32 %v1148, %v1163
        %v1220 = vadd.f32 %v1149, %v1163
        %v1221 = vadd.f32 %v1150, %v1163
        %v1222 = vadd.f32 %v1151, %v1163
        %v1223 = vadd.f32 %v1152, %v1163
        %v1224 = vadd.f32 %v1153, %v1163
        %v1225 = vadd.f32 %v1154, %v1163
        %v1226 = vadd.f32 %v1155, %v1163
        %v1227 = vadd.f32 %v1156, %v1163
        %v1228 = vadd.f32 %v1157, %v1163
        %1229 = vst [vmem:[%s188] sm:$0xff] %v1165
        %1230 = vst [vmem:[%s188 + $0x8] sm:$0xff] %v1166
        %1231 = vst [vmem:[%s188 + $0x10] sm:$0xff] %v1167
        %1232 = vst [vmem:[%s188 + $0x18] sm:$0xff] %v1168
        %1233 = vst [vmem:[%s188 + $0x20] sm:$0xff] %v1169
        %1234 = vst [vmem:[%s188 + $0x28] sm:$0xff] %v1170
        %1235 = vst [vmem:[%s188 + $0x30] sm:$0xff] %v1171
        %1236 = vst [vmem:[%s188 + $0x38] sm:$0xff] %v1172
        %1237 = vst [vmem:[%s188 + $0x40] sm:$0xff] %v1173
        %1238 = vst [vmem:[%s188 + $0x48] sm:$0xff] %v1174
        %1239 = vst [vmem:[%s188 + $0x50] sm:$0xff] %v1175
        %1240 = vst [vmem:[%s188 + $0x58] sm:$0xff] %v1176
        %1241 = vst [vmem:[%s188 + $0x60] sm:$0xff] %v1177
        %1242 = vst [vmem:[%s188 + $0x68] sm:$0xff] %v1178
        %1243 = vst [vmem:[%s188 + $0x70] sm:$0xff] %v1179
        %1244 = vst [vmem:[%s188 + $0x78] sm:$0xff] %v1180
        %1245 = vst [vmem:[%s188 + $0x80] sm:$0xff] %v1181
        %1246 = vst [vmem:[%s188 + $0x88] sm:$0xff] %v1182
        %1247 = vst [vmem:[%s188 + $0x90] sm:$0xff] %v1183
        %1248 = vst [vmem:[%s188 + $0x98] sm:$0xff] %v1184
        %1249 = vst [vmem:[%s188 + $0xa0] sm:$0xff] %v1185
        %1250 = vst [vmem:[%s188 + $0xa8] sm:$0xff] %v1186
        %1251 = vst [vmem:[%s188 + $0xb0] sm:$0xff] %v1187
        %1252 = vst [vmem:[%s188 + $0xb8] sm:$0xff] %v1188
        %1253 = vst [vmem:[%s188 + $0xc0] sm:$0xff] %v1189
        %1254 = vst [vmem:[%s188 + $0xc8] sm:$0xff] %v1190
        %1255 = vst [vmem:[%s188 + $0xd0] sm:$0xff] %v1191
        %1256 = vst [vmem:[%s188 + $0xd8] sm:$0xff] %v1192
        %1257 = vst [vmem:[%s188 + $0xe0] sm:$0xff] %v1193
        %1258 = vst [vmem:[%s188 + $0xe8] sm:$0xff] %v1194
        %1259 = vst [vmem:[%s188 + $0xf0] sm:$0xff] %v1195
        %1260 = vst [vmem:[%s188 + $0xf8] sm:$0xff] %v1196
        %1261 = vst [vmem:[%s188 + $0x100] sm:$0xff] %v1197
        %1262 = vst [vmem:[%s188 + $0x108] sm:$0xff] %v1198
        %1263 = vst [vmem:[%s188 + $0x110] sm:$0xff] %v1199
        %1264 = vst [vmem:[%s188 + $0x118] sm:$0xff] %v1200
        %1265 = vst [vmem:[%s188 + $0x120] sm:$0xff] %v1201
        %1266 = vst [vmem:[%s188 + $0x128] sm:$0xff] %v1202
        %1267 = vst [vmem:[%s188 + $0x130] sm:$0xff] %v1203
        %1268 = vst [vmem:[%s188 + $0x138] sm:$0xff] %v1204
        %1269 = vst [vmem:[%s188 + $0x140] sm:$0xff] %v1205
        %1270 = vst [vmem:[%s188 + $0x148] sm:$0xff] %v1206
        %1271 = vst [vmem:[%s188 + $0x150] sm:$0xff] %v1207
        %1272 = vst [vmem:[%s188 + $0x158] sm:$0xff] %v1208
        %1273 = vst [vmem:[%s188 + $0x160] sm:$0xff] %v1209
        %1274 = vst [vmem:[%s188 + $0x168] sm:$0xff] %v1210
        %1275 = vst [vmem:[%s188 + $0x170] sm:$0xff] %v1211
        %1276 = vst [vmem:[%s188 + $0x178] sm:$0xff] %v1212
        %1277 = vst [vmem:[%s188 + $0x180] sm:$0xff] %v1213
        %1278 = vst [vmem:[%s188 + $0x188] sm:$0xff] %v1214
        %1279 = vst [vmem:[%s188 + $0x190] sm:$0xff] %v1215
        %1280 = vst [vmem:[%s188 + $0x198] sm:$0xff] %v1216
        %1281 = vst [vmem:[%s188 + $0x1a0] sm:$0xff] %v1217
        %1282 = vst [vmem:[%s188 + $0x1a8] sm:$0xff] %v1218
        %1283 = vst [vmem:[%s188 + $0x1b0] sm:$0xff] %v1219
        %1284 = vst [vmem:[%s188 + $0x1b8] sm:$0xff] %v1220
        %1285 = vst [vmem:[%s188 + $0x1c0] sm:$0xff] %v1221
        %1286 = vst [vmem:[%s188 + $0x1c8] sm:$0xff] %v1222
        %1287 = vst [vmem:[%s188 + $0x1d0] sm:$0xff] %v1223
        %1288 = vst [vmem:[%s188 + $0x1d8] sm:$0xff] %v1224
        %1289 = vst [vmem:[%s188 + $0x1e0] sm:$0xff] %v1225
        %1290 = vst [vmem:[%s188 + $0x1e8] sm:$0xff] %v1226
        %1291 = vst [vmem:[%s188 + $0x1f0] sm:$0xff] %v1227
        %1292 = vst [vmem:[%s188 + $0x1f8] sm:$0xff] %v1228
        %s1293 = sand.u32 %s96, 1
        %s1294 = scalar_lea.sflag [#allocation4], %s1293
        %s1295 = sand.u32 %s96, 1
        %s1296 = smul.addr %s1295, 512
        %s1297 = scalar_lea.vmem [#allocation5], %s1296
        // Predicated region
        $region37: #{with_bias_layernorm.1} parent=31 // pred_check
          %p1298 = pneg %p106
        $region38: #{with_bias_layernorm.1} parent=31 // pred_check_branch
          %1300 = sbr.rel (%p1298) target = $region40
        $region39: #{with_bias_layernorm.1} parent=31 // pred_region
          %s1301 = smul.u32 64, %s20
          %s1303 = ssub.s32 8192, 8192
          %1304 = vsyncadd %s1294, %s1303
          %s1305 = smul.addr %s1301, 128
          %s1306 = scalar_lea.hbm %s3, %s1305
          %s1307 = sshll.u32 %s1297, 4
          %s1308 = int_to_ptr.vmem [resolvable:$true] %s1307
          %1313 = dma.vmem_to_hbm [thread:$0]  %s1308, 8192, %s1306, %s1294, 128, 128, 8
        $region40: #{with_bias_layernorm.1} parent=31 // pred_fallthru
          _
      $region32: #{with_bias_layernorm.1} parent=5 // pred_fallthru
        _
      %p1314 = scmp.le.s32.totalorder 2, %s15
      // Predicated region
      $region41: #{with_bias_layernorm.1} parent=5 // pred_check
        %p1315 = pneg %p1314
      $region42: #{with_bias_layernorm.1} parent=5 // pred_check_branch
        %1317 = sbr.rel (%p1315) target = $region44
      $region43: #{with_bias_layernorm.1} parent=5 // pred_region
        %s1318 = ssub.s32 %s15, 2
        // Predicated region
        $region45: #{with_bias_layernorm.1} parent=43 // pred_check
          %p1319 = pneg %p112
        $region46: #{with_bias_layernorm.1} parent=43 // pred_check_branch
          %1321 = sbr.rel (%p1319) target = $region48
        $region47: #{with_bias_layernorm.1} parent=43 // pred_region
          %s1322 = sand.u32 %s97, 1
          %s1323 = scalar_lea.sflag [#allocation4], %s1322
          %s1324 = sand.u32 %s97, 1
          %s1325 = smul.addr %s1324, 512
          %s1326 = scalar_lea.vmem [#allocation5], %s1325
          %1327 = dma.done %s1323, 8192
        $region48: #{with_bias_layernorm.1} parent=43 // pred_fallthru
          _
      $region44: #{with_bias_layernorm.1} parent=5 // pred_fallthru
        _
    $region6: #{with_bias_layernorm.1} parent=1 // loop_footer
      %s19 = sadd.s32 1, %s15
    $region7: #{with_bias_layernorm.1} parent=1 // loop_footer_branch
      %14 = sbr.rel target = $region3
    $region8: #{with_bias_layernorm.1} parent=1 // loop_exit
      _
    %1328 = vsyncpa [#allocation3], 1
    %s1329 = scalar_lea.sflag [#allocation3], 1
    %1330 = vsyncpa %s1329, 1
    %1331 = vsyncpa [#allocation4], 1
    %s1332 = scalar_lea.sflag [#allocation4], 1
    %1333 = vsyncpa %s1332, 1

</llo_original>
